<compile_context>
chip_gen: v6e
topology: v6e:2x2x1
jax: 0.10.0
libtpu: 0.0.40
codegen_flags: <defaults>
</compile_context>

<pallas_src>
import jax
import jax.numpy as jnp
from jax.experimental import pallas as pl
from jax.experimental.pallas import tpu as pltpu

_LANE = 128


def _round_up(v, m):
    return -(-v // m) * m


def _mlp_kernel(x_ref, w1_ref, b1_ref, w2_ref, b2_ref, o_ref):
    # Layer 1: MXU matmul, f32 accumulation, f32 bias add.
    h = jnp.dot(x_ref[...], w1_ref[...], preferred_element_type=jnp.float32)
    h = h + b1_ref[...]                      # (1, H) broadcasts over rows
    # LeakyReLU(0.2): max(h, 0.2*h) == where(h > 0, h, 0.2*h) for slope in (0,1).
    h = jnp.maximum(h, 0.2 * h)
    # Layer 2: feed the MXU in the streaming dtype, accumulate f32, f32 bias.
    y = jnp.dot(h.astype(w2_ref.dtype), w2_ref[...],
                preferred_element_type=jnp.float32)
    y = y + b2_ref[...]                      # (1, O)
    o_ref[...] = y.astype(o_ref.dtype)


def mlp_forward(x, w1, b1, w2, b2, *, tile_b=None, out_dtype=None,
                vmem_budget_bytes=24 * 1024 * 1024,
                target_step_bytes=2 * 1024 * 1024):
    """x: (B, D), w1: (D, H), b1: (H,), w2: (H, O), b2: (O,) -> (B, O).

    x is streamed in its own dtype (hand the kernel bf16 x from the producer
    to halve read traffic); weights are cast to x.dtype (tiny), biases are f32.
    """
    B, D = x.shape
    H = w1.shape[1]
    O = w2.shape[1]
    compute_dtype = x.dtype                  # never re-materialize x in HBM
    if out_dtype is None:
        out_dtype = x.dtype

    w1_c = w1.astype(compute_dtype)          # weights are tiny; cast is cheap
    w2_c = w2.astype(compute_dtype)
    b1_2d = b1.astype(jnp.float32).reshape(1, H)
    b2_2d = b2.astype(jnp.float32).reshape(1, O)

    itemsize = jnp.dtype(compute_dtype).itemsize
    out_itemsize = jnp.dtype(out_dtype).itemsize
    sub = 16 if itemsize < 4 else 8          # sublane multiple for x blocks

    # --- VMEM accounting with lane/sublane padding (VMEM tiles are (sub,128)).
    w_sub = sub
    weight_vmem = 2 * (                      # counted at 2 buffers (conservative)
        _round_up(D, w_sub) * _round_up(H, _LANE) * itemsize
        + _round_up(H, w_sub) * _round_up(O, _LANE) * itemsize
        + 8 * _round_up(H, _LANE) * 4
        + 8 * _round_up(O, _LANE) * 4)
    per_row_vmem = 2 * (_round_up(D, _LANE) * itemsize
                        + _round_up(O, _LANE) * out_itemsize)

    if tile_b is None:
        # Rows/step so (x read + out write) HBM bytes ~= target, and the
        # double-buffered *padded* tiles fit the VMEM budget.
        row_hbm = D * itemsize + O * out_itemsize
        cap_rows = max(sub, (target_step_bytes // row_hbm) // sub * sub)
        avail = max(vmem_budget_bytes - weight_vmem, per_row_vmem * sub)
        vmem_rows = max(sub, (avail // per_row_vmem) // sub * sub)
        tile_b = min(cap_rows, vmem_rows)
        if B >= 2 * sub:
            # Guarantee >= 2 grid steps so ("parallel",) shards over v7x's 2 TCs.
            tile_b = min(tile_b, _round_up(pl.cdiv(B, 2), sub))
        else:
            tile_b = min(tile_b, B)          # single full-extent block
        tile_b = max(1, tile_b)
    if tile_b != B and tile_b % sub != 0:
        raise ValueError(
            f"tile_b={tile_b} must be a multiple of {sub} for {compute_dtype} "
            f"(or equal to the batch size {B})")

    # No jnp.pad: Pallas masks the partial last tile's writeback; rows are
    # independent so the undefined rows in the padded input block are harmless.
    num_tiles = pl.cdiv(B, tile_b)

    est_vmem = weight_vmem + tile_b * per_row_vmem
    compiler_kwargs = dict(dimension_semantics=("parallel",))
    est_with_headroom = int(est_vmem * 1.25) + (2 << 20)
    if est_with_headroom > 16 * 1024 * 1024:     # above v5e's default scoped VMEM
        try:
            vmem_cap = pltpu.get_tpu_info().vmem_capacity_bytes
        except Exception:                        # pragma: no cover
            vmem_cap = 64 * 1024 * 1024          # conservative (v7x per-TC)
        hard_cap = min(112 * 1024 * 1024, int(vmem_cap * 0.85))
        if est_vmem > hard_cap:
            raise ValueError(
                f"tile_b={tile_b} needs ~{est_vmem} B of VMEM which exceeds this "
                f"chip's usable capacity (~{hard_cap} B); use a smaller tile_b")
        compiler_kwargs["vmem_limit_bytes"] = min(est_with_headroom, hard_cap)

    out = pl.pallas_call(
        _mlp_kernel,
        out_shape=jax.ShapeDtypeStruct((B, O), out_dtype),
        grid_spec=pltpu.PrefetchScalarGridSpec(
            num_scalar_prefetch=0,
            grid=(num_tiles,),
            in_specs=[
                pl.BlockSpec((tile_b, D), lambda i: (i, 0)),   # x: streamed
                pl.BlockSpec((D, H), lambda i: (0, 0)),        # w1: resident
                pl.BlockSpec((1, H), lambda i: (0, 0)),        # b1: resident
                pl.BlockSpec((H, O), lambda i: (0, 0)),        # w2: resident
                pl.BlockSpec((1, O), lambda i: (0, 0)),        # b2: resident
            ],
            out_specs=pl.BlockSpec((tile_b, O), lambda i: (i, 0)),
        ),
        compiler_params=pltpu.CompilerParams(**compiler_kwargs),
    )(x, w1_c, b1_2d, w2_c, b2_2d)
    return out


def reference_forward(x, w1, b1, w2, b2):
    h = x @ w1 + b1
    h = jnp.where(h > 0, h, 0.2 * h)
    return h @ w2 + b2


if __name__ == "__main__":
    # Shapes consistent with _MultiLayerPercep(input_dim=32, output_dim=8).
    B, D, O = 256, 32, 8
    H = D // 2

    key = jax.random.PRNGKey(0)
    kx, k1, k2, k3, k4 = jax.random.split(key, 5)

    x = jax.random.normal(kx, (B, D), dtype=jnp.float32)
    # Deterministic, PyTorch-Linear-like uniform init (scale 1/sqrt(fan_in)).
    w1 = jax.random.uniform(k1, (D, H), jnp.float32, -1.0, 1.0) / jnp.sqrt(D)
    b1 = jax.random.uniform(k2, (H,), jnp.float32, -1.0, 1.0) / jnp.sqrt(D)
    w2 = jax.random.uniform(k3, (H, O), jnp.float32, -1.0, 1.0) / jnp.sqrt(H)
    b2 = jax.random.uniform(k4, (O,), jnp.float32, -1.0, 1.0) / jnp.sqrt(H)

    ref = reference_forward(x, w1, b1, w2, b2)

    # 1) f32 path with an explicit small tile -> 4-step grid (pipelined DMAs).
    out_f32 = jax.block_until_ready(mlp_forward(x, w1, b1, w2, b2, tile_b=64))
    assert out_f32.shape == (B, O)
    assert jnp.allclose(out_f32, ref, atol=1e-4, rtol=1e-4), "f32 mismatch"

    # 2) Ragged batch with auto tiling: no wrapper-side jnp.pad, the partial
    #    last tile's writeback is masked by Pallas.
    Br = 200
    out_ragged = jax.block_until_ready(mlp_forward(x[:Br], w1, b1, w2, b2))
    assert out_ragged.shape == (Br, O)
    assert jnp.allclose(out_ragged, ref[:Br], atol=1e-4, rtol=1e-4), \
        "ragged mismatch"

    # 3) bf16 streaming only when the producer already supplies bf16 x
    #    (f32 MXU accumulation; f32 output here for a tighter check).
    x_bf16 = x.astype(jnp.bfloat16)
    ref_bf16_in = reference_forward(x_bf16.astype(jnp.float32), w1, b1, w2, b2)
    out_bf16 = jax.block_until_ready(
        mlp_forward(x_bf16, w1, b1, w2, b2, out_dtype=jnp.float32))
    assert out_bf16.shape == (B, O)
    assert jnp.allclose(out_bf16, ref_bf16_in, atol=5e-2, rtol=5e-2), \
        "bf16 mismatch"

    print("KERNEL_OK")
</pallas_src>

<mosaic_0001>
module attributes {stable_mosaic.version = 11 : i64} {
  func.func @_mlp_kernel(%arg0: i32, %arg1: memref<64x32xf32, #tpu.memory_space<vmem>>, %arg2: memref<32x16xf32, #tpu.memory_space<vmem>>, %arg3: memref<1x16xf32, #tpu.memory_space<vmem>>, %arg4: memref<16x8xf32, #tpu.memory_space<vmem>>, %arg5: memref<1x8xf32, #tpu.memory_space<vmem>>, %arg6: memref<64x8xf32, #tpu.memory_space<vmem>>) attributes {dimension_semantics = [#tpu.dimension_semantics<parallel>], iteration_bounds = array<i64: 4>, scalar_prefetch = 0 : i64, scratch_operands = 0 : i64, tpu.core_type = #tpu.core_type<tc>, window_params = [{transform_indices = @transform_0, window_bounds = array<i64: 64, 32>}, {pipeline_mode = #tpu.pipeline_mode<synchronous>, transform_indices = @transform_1, window_bounds = array<i64: 32, 16>}, {pipeline_mode = #tpu.pipeline_mode<synchronous>, transform_indices = @transform_2, window_bounds = array<i64: 1, 16>}, {pipeline_mode = #tpu.pipeline_mode<synchronous>, transform_indices = @transform_3, window_bounds = array<i64: 16, 8>}, {pipeline_mode = #tpu.pipeline_mode<synchronous>, transform_indices = @transform_4, window_bounds = array<i64: 1, 8>}, {transform_indices = @transform_5, window_bounds = array<i64: 64, 8>}]} {
    %c0 = arith.constant 0 : index
    %c0_0 = arith.constant 0 : index
    %0 = vector.load %arg1[%c0, %c0_0] : memref<64x32xf32, #tpu.memory_space<vmem>>, vector<64x32xf32>
    %c0_1 = arith.constant 0 : index
    %c0_2 = arith.constant 0 : index
    %1 = vector.load %arg2[%c0_1, %c0_2] : memref<32x16xf32, #tpu.memory_space<vmem>>, vector<32x16xf32>
    %cst = arith.constant dense<0.000000e+00> : vector<64x16xf32>
    %2 = tpu.matmul %0, %1, %cst {dimension_numbers = #tpu.dot_dimension_numbers<[1], [0], [0], [1], [0, 0, 1, 1], [], []>} : vector<64x32xf32>, vector<32x16xf32>, vector<64x16xf32> -> vector<64x16xf32>
    %c0_3 = arith.constant 0 : index
    %c0_4 = arith.constant 0 : index
    %3 = vector.load %arg3[%c0_3, %c0_4] : memref<1x16xf32, #tpu.memory_space<vmem>>, vector<1x16xf32>
    %4 = vector.broadcast %3 : vector<1x16xf32> to vector<64x16xf32>
    %5 = arith.addf %2, %4 : vector<64x16xf32>
    %cst_5 = arith.constant 2.000000e-01 : f32
    %6 = vector.broadcast %cst_5 : f32 to vector<64x16xf32>
    %7 = arith.mulf %6, %5 : vector<64x16xf32>
    %8 = arith.maximumf %5, %7 : vector<64x16xf32>
    %c0_6 = arith.constant 0 : index
    %c0_7 = arith.constant 0 : index
    %9 = vector.load %arg4[%c0_6, %c0_7] : memref<16x8xf32, #tpu.memory_space<vmem>>, vector<16x8xf32>
    %cst_8 = arith.constant dense<0.000000e+00> : vector<64x8xf32>
    %10 = tpu.matmul %8, %9, %cst_8 {dimension_numbers = #tpu.dot_dimension_numbers<[1], [0], [0], [1], [0, 0, 1, 1], [], []>} : vector<64x16xf32>, vector<16x8xf32>, vector<64x8xf32> -> vector<64x8xf32>
    %c0_9 = arith.constant 0 : index
    %c0_10 = arith.constant 0 : index
    %11 = vector.load %arg5[%c0_9, %c0_10] : memref<1x8xf32, #tpu.memory_space<vmem>>, vector<1x8xf32>
    %12 = vector.broadcast %11 : vector<1x8xf32> to vector<64x8xf32>
    %13 = arith.addf %10, %12 : vector<64x8xf32>
    %c0_11 = arith.constant 0 : index
    %c0_12 = arith.constant 0 : index
    %14 = vector.load %arg6[%c0_11, %c0_12] : memref<64x8xf32, #tpu.memory_space<vmem>>, vector<64x8xf32>
    tpu.vector_store %arg6[%c0_11, %c0_12], %13 {strides = array<i32>} : memref<64x8xf32, #tpu.memory_space<vmem>>, vector<64x8xf32>,
    return
  }
  func.func @transform_0(%arg0: i32) -> (i32, i32) {
    %c0_i32 = arith.constant 0 : i32
    %c0_i32_0 = arith.constant 0 : i32
    return %arg0, %c0_i32 : i32, i32
  }
  func.func @transform_1(%arg0: i32) -> (i32, i32) {
    %c0_i32 = arith.constant 0 : i32
    %c0_i32_0 = arith.constant 0 : i32
    %c0_i32_1 = arith.constant 0 : i32
    return %c0_i32, %c0_i32_0 : i32, i32
  }
  func.func @transform_2(%arg0: i32) -> (i32, i32) {
    %c0_i32 = arith.constant 0 : i32
    %c0_i32_0 = arith.constant 0 : i32
    %c0_i32_1 = arith.constant 0 : i32
    return %c0_i32, %c0_i32_0 : i32, i32
  }
  func.func @transform_3(%arg0: i32) -> (i32, i32) {
    %c0_i32 = arith.constant 0 : i32
    %c0_i32_0 = arith.constant 0 : i32
    %c0_i32_1 = arith.constant 0 : i32
    return %c0_i32, %c0_i32_0 : i32, i32
  }
  func.func @transform_4(%arg0: i32) -> (i32, i32) {
    %c0_i32 = arith.constant 0 : i32
    %c0_i32_0 = arith.constant 0 : i32
    %c0_i32_1 = arith.constant 0 : i32
    return %c0_i32, %c0_i32_0 : i32, i32
  }
  func.func @transform_5(%arg0: i32) -> (i32, i32) {
    %c0_i32 = arith.constant 0 : i32
    %c0_i32_0 = arith.constant 0 : i32
    return %arg0, %c0_i32 : i32, i32
  }
}

</mosaic_0001>

<llo_original>
// kernel: tpu_custom_call.1
$region0: #{tpu_custom_call.1}
  #allocation0 [shape = 'u32[]', space=smem, size = 0x4, offset = 0x4, fixed_abs, tag = 'smem constant byte address 0x4 - core index']
  #allocation1 [shape = 'u32[144,128]{1,0:T(1,128)}', space=vmem, size = 0x12000, scoped, tag = 'internal scratch']
  %s0 = inlined_call_operand.vmem [shape: f32[256,32], index: 0, kind: input, shape index: {}]
  %s1 = inlined_call_operand.vmem [shape: f32[32,16], index: 1, kind: input, shape index: {}]
  %s2 = inlined_call_operand.vmem [shape: f32[1,16], index: 2, kind: input, shape index: {}]
  %s3 = inlined_call_operand.vmem [shape: f32[16,8], index: 3, kind: input, shape index: {}]
  %s4 = inlined_call_operand.vmem [shape: f32[1,8], index: 4, kind: input, shape index: {}]
  %s5 = inlined_call_operand.vmem [shape: f32[256,8], index: 5, kind: output, shape index: {}]
  %s6 = sld [smem:[#allocation0]]
  $region53: #{tpu_custom_call.1} parent=0
    _
  %s8 = ssub.s32 1, %s6
  %s9 = scalar_select 0, %s8, %s6
  loop: start=0, step=1, limit=6
  $region2: #{tpu_custom_call.1} parent=0 // loop_pre_header
    _
  $region3: #{tpu_custom_call.1} parent=0 // loop_header
    %s11 = sphi 0, %s15
    %p12 = scmp.ge.s32.totalorder %s11, 6
    %s21 = sphi 0, %s23
    %s24 = sphi 0, %s21
    %s25 = sphi 0, %s24
    %s41 = sphi 0, %s25
    %s45 = sphi 0, %s45
    %s47 = sphi 0, %s45
    %s48 = sphi 0, %s47
    %s62 = sphi 0, %s48
    %s66 = sphi 0, %s66
    %s68 = sphi 0, %s66
    %s69 = sphi 0, %s68
    %s83 = sphi 0, %s69
    %s87 = sphi 0, %s87
    %s89 = sphi 0, %s87
    %s90 = sphi 0, %s89
    %s104 = sphi 0, %s90
    %s108 = sphi 0, %s108
    %s110 = sphi 0, %s108
    %s111 = sphi 0, %s110
    %s125 = sphi 0, %s111
    %s131 = sphi 0, %s133
    %s134 = sphi 0, %s131
    %s135 = sphi 0, %s134
    %s151 = sphi 0, %s135
  $region4: #{tpu_custom_call.1} parent=0 // loop_header_branch
    %14 = sbr.rel (%p12) target = $region8
  $region5: #{tpu_custom_call.1} parent=0 // loop_body
    %s16 = ssub.s32 %s11, 1
    %s17 = ssub.s32 %s11, 2
    %s18 = sadd.s32 %s11, 1
    %s19 = ssub.s32 %s11, %s18
    %p20 = scmp.eq.s32.totalorder %s19, 0
    %s22 = sadd.s32 %s21, 1
    %s23 = scalar_select %p20, %s21, %s22
    %p26 = pneg %p20
    %p27 = scmp.eq.s32.totalorder %s11, 3
    %p28 = por %p26, %p27
    %p29 = scmp.ne.s32.totalorder %s21, %s24
    %p30 = scmp.eq.s32.totalorder %s11, 0
    %p31 = por %p29, %p30
    %p32 = scmp.ne.s32.totalorder %s21, %s24
    %p33 = scmp.eq.s32.totalorder %s16, 3
    %p34 = por %p32, %p33
    %p35 = scmp.ne.s32.totalorder %s24, %s25
    %p36 = scmp.eq.s32.totalorder %s16, 0
    %p37 = por %p35, %p36
    %p38 = scmp.ne.s32.totalorder %s24, %s25
    %p39 = scmp.eq.s32.totalorder %s17, 3
    %p40 = por %p38, %p39
    %p42 = scmp.ne.s32.totalorder %s25, %s41
    %p43 = scmp.eq.s32.totalorder %s17, 0
    %p44 = por %p42, %p43
    %s46 = sadd.s32 %s45, 1
    %p49 = scmp.eq.s32.totalorder %s11, 3
    %p50 = scmp.ne.s32.totalorder %s45, %s47
    %p51 = scmp.eq.s32.totalorder %s11, 0
    %p52 = por %p50, %p51
    %p53 = scmp.ne.s32.totalorder %s45, %s47
    %p54 = scmp.eq.s32.totalorder %s16, 3
    %p55 = por %p53, %p54
    %p56 = scmp.ne.s32.totalorder %s47, %s48
    %p57 = scmp.eq.s32.totalorder %s16, 0
    %p58 = por %p56, %p57
    %p59 = scmp.ne.s32.totalorder %s47, %s48
    %p60 = scmp.eq.s32.totalorder %s17, 3
    %p61 = por %p59, %p60
    %p63 = scmp.ne.s32.totalorder %s48, %s62
    %p64 = scmp.eq.s32.totalorder %s17, 0
    %p65 = por %p63, %p64
    %s67 = sadd.s32 %s66, 1
    %p70 = scmp.eq.s32.totalorder %s11, 3
    %p71 = scmp.ne.s32.totalorder %s66, %s68
    %p72 = scmp.eq.s32.totalorder %s11, 0
    %p73 = por %p71, %p72
    %p74 = scmp.ne.s32.totalorder %s66, %s68
    %p75 = scmp.eq.s32.totalorder %s16, 3
    %p76 = por %p74, %p75
    %p77 = scmp.ne.s32.totalorder %s68, %s69
    %p78 = scmp.eq.s32.totalorder %s16, 0
    %p79 = por %p77, %p78
    %p80 = scmp.ne.s32.totalorder %s68, %s69
    %p81 = scmp.eq.s32.totalorder %s17, 3
    %p82 = por %p80, %p81
    %p84 = scmp.ne.s32.totalorder %s69, %s83
    %p85 = scmp.eq.s32.totalorder %s17, 0
    %p86 = por %p84, %p85
    %s88 = sadd.s32 %s87, 1
    %p91 = scmp.eq.s32.totalorder %s11, 3
    %p92 = scmp.ne.s32.totalorder %s87, %s89
    %p93 = scmp.eq.s32.totalorder %s11, 0
    %p94 = por %p92, %p93
    %p95 = scmp.ne.s32.totalorder %s87, %s89
    %p96 = scmp.eq.s32.totalorder %s16, 3
    %p97 = por %p95, %p96
    %p98 = scmp.ne.s32.totalorder %s89, %s90
    %p99 = scmp.eq.s32.totalorder %s16, 0
    %p100 = por %p98, %p99
    %p101 = scmp.ne.s32.totalorder %s89, %s90
    %p102 = scmp.eq.s32.totalorder %s17, 3
    %p103 = por %p101, %p102
    %p105 = scmp.ne.s32.totalorder %s90, %s104
    %p106 = scmp.eq.s32.totalorder %s17, 0
    %p107 = por %p105, %p106
    %s109 = sadd.s32 %s108, 1
    %p112 = scmp.eq.s32.totalorder %s11, 3
    %p113 = scmp.ne.s32.totalorder %s108, %s110
    %p114 = scmp.eq.s32.totalorder %s11, 0
    %p115 = por %p113, %p114
    %p116 = scmp.ne.s32.totalorder %s108, %s110
    %p117 = scmp.eq.s32.totalorder %s16, 3
    %p118 = por %p116, %p117
    %p119 = scmp.ne.s32.totalorder %s110, %s111
    %p120 = scmp.eq.s32.totalorder %s16, 0
    %p121 = por %p119, %p120
    %p122 = scmp.ne.s32.totalorder %s110, %s111
    %p123 = scmp.eq.s32.totalorder %s17, 3
    %p124 = por %p122, %p123
    %p126 = scmp.ne.s32.totalorder %s111, %s125
    %p127 = scmp.eq.s32.totalorder %s17, 0
    %p128 = por %p126, %p127
    %s129 = ssub.s32 %s11, %s18
    %p130 = scmp.eq.s32.totalorder %s129, 0
    %s132 = sadd.s32 %s131, 1
    %s133 = scalar_select %p130, %s131, %s132
    %p136 = pneg %p130
    %p137 = scmp.eq.s32.totalorder %s11, 3
    %p138 = por %p136, %p137
    %p139 = scmp.ne.s32.totalorder %s131, %s134
    %p140 = scmp.eq.s32.totalorder %s11, 0
    %p141 = por %p139, %p140
    %p142 = scmp.ne.s32.totalorder %s131, %s134
    %p143 = scmp.eq.s32.totalorder %s16, 3
    %p144 = por %p142, %p143
    %p145 = scmp.ne.s32.totalorder %s134, %s135
    %p146 = scmp.eq.s32.totalorder %s16, 0
    %p147 = por %p145, %p146
    %p148 = scmp.ne.s32.totalorder %s134, %s135
    %p149 = scmp.eq.s32.totalorder %s17, 3
    %p150 = por %p148, %p149
    %p152 = scmp.ne.s32.totalorder %s135, %s151
    %p153 = scmp.eq.s32.totalorder %s17, 0
    %p154 = por %p152, %p153
    %p155 = scmp.le.s32.totalorder 1, %s11
    %p156 = scmp.lt.s32.totalorder %s11, 5
    %p157 = pnand %p155, %p156
    %p158 = pneg %p157
    // Predicated region
    $region9: #{tpu_custom_call.1} parent=5 // pred_check
      _
    $region10: #{tpu_custom_call.1} parent=5 // pred_check_branch
      %160 = sbr.rel (%p157) target = $region12
    $region11: #{tpu_custom_call.1} parent=5 // pred_region
      %s161 = ssub.s32 %s11, 1
      // Predicated region
      $region13: #{tpu_custom_call.1} parent=11 // pred_check
        %p162 = pneg %p58
      $region14: #{tpu_custom_call.1} parent=11 // pred_check_branch
        %164 = sbr.rel (%p162) target = $region16
      $region15: #{tpu_custom_call.1} parent=11 // pred_region
        _
      $region16: #{tpu_custom_call.1} parent=11 // pred_fallthru
        _
      // Predicated region
      $region17: #{tpu_custom_call.1} parent=11 // pred_check
        %p165 = pneg %p79
      $region18: #{tpu_custom_call.1} parent=11 // pred_check_branch
        %167 = sbr.rel (%p165) target = $region20
      $region19: #{tpu_custom_call.1} parent=11 // pred_region
        _
      $region20: #{tpu_custom_call.1} parent=11 // pred_fallthru
        _
      // Predicated region
      $region21: #{tpu_custom_call.1} parent=11 // pred_check
        %p168 = pneg %p100
      $region22: #{tpu_custom_call.1} parent=11 // pred_check_branch
        %170 = sbr.rel (%p168) target = $region24
      $region23: #{tpu_custom_call.1} parent=11 // pred_region
        _
      $region24: #{tpu_custom_call.1} parent=11 // pred_fallthru
        _
      // Predicated region
      $region25: #{tpu_custom_call.1} parent=11 // pred_check
        %p171 = pneg %p121
      $region26: #{tpu_custom_call.1} parent=11 // pred_check_branch
        %173 = sbr.rel (%p171) target = $region28
      $region27: #{tpu_custom_call.1} parent=11 // pred_region
        _
      $region28: #{tpu_custom_call.1} parent=11 // pred_fallthru
        _
    $region12: #{tpu_custom_call.1} parent=5 // pred_fallthru
      _
    %p174 = scmp.lt.s32.totalorder %s11, 4
    // Predicated region
    $region29: #{tpu_custom_call.1} parent=5 // pred_check
      %p175 = pneg %p174
    $region30: #{tpu_custom_call.1} parent=5 // pred_check_branch
      %177 = sbr.rel (%p175) target = $region32
    $region31: #{tpu_custom_call.1} parent=5 // pred_region
      // Predicated region
      $region33: #{tpu_custom_call.1} parent=31 // pred_check
        %p178 = pneg %p31
      $region34: #{tpu_custom_call.1} parent=31 // pred_check_branch
        %180 = sbr.rel (%p178) target = $region36
      $region35: #{tpu_custom_call.1} parent=31 // pred_region
        %s181 = smul.u32 8, %s11
        %p182 = scmp.lt.s32.totalorder %s181, 31
        %s183 = scalar_select %p182, %s181, 31
        %s184 = smul.addr %s183, 8
        %s185 = scalar_lea.vmem %s0, %s184
        %s186 = smul.u32 8, %s11
      $region36: #{tpu_custom_call.1} parent=31 // pred_fallthru
        _
    $region32: #{tpu_custom_call.1} parent=5 // pred_fallthru
      _
    %p187 = scmp.le.s32.totalorder 1, %s11
    %p188 = scmp.lt.s32.totalorder %s11, 5
    %p189 = pnand %p187, %p188
    %p190 = pneg %p189
    // Predicated region
    $region37: #{tpu_custom_call.1} parent=5 // pred_check
      _
    $region38: #{tpu_custom_call.1} parent=5 // pred_check_branch
      %192 = sbr.rel (%p189) target = $region40
    $region39: #{tpu_custom_call.1} parent=5 // pred_region
      %s193 = ssub.s32 %s11, 1
      %s194 = smul.u32 8, %s16
      %p195 = scmp.lt.s32.totalorder %s194, 31
      %s196 = scalar_select %p195, %s194, 31
      %s197 = smul.addr %s196, 8
      %s198 = scalar_lea.vmem %s0, %s197
      %p199 = pneg %p37
      %p200 = pneg %p34
      %p201 = pneg %p58
      %p202 = pneg %p55
      %p203 = pneg %p79
      %p204 = pneg %p76
      %p205 = pneg %p100
      %p206 = pneg %p97
      %p207 = pneg %p121
      %p208 = pneg %p118
      %p209 = pneg %p147
      %p210 = pneg %p144
      %s211 = smul.u32 8, %s16
      %p212 = scmp.lt.s32.totalorder %s211, 31
      %s213 = scalar_select %p212, %s211, 31
      %s214 = smul.addr %s213, 8
      %s215 = scalar_lea.vmem %s5, %s214
      %s216 = smul.u32 8, %s16
      %p217 = scmp.lt.s32.totalorder %s216, 31
      %s218 = scalar_select %p217, %s216, 31
      %s219 = smul.addr %s218, 8
      %s220 = scalar_lea.vmem %s0, %s219
      %s221 = smul.u32 8, %s16
      %s222 = smul.u32 8, %s16
      %p223 = scmp.lt.s32.totalorder %s222, 31
      %s224 = scalar_select %p223, %s222, 31
      %s225 = smul.addr %s224, 8
      %s226 = scalar_lea.vmem %s5, %s225
      %s227 = smul.u32 8, %s16
      %v228 = vld [vmem:[%s220] sm:$0xff]
      %v229 = vld [vmem:[%s220 + $0x8] sm:$0xff]
      %v230 = vld [vmem:[%s220 + $0x10] sm:$0xff]
      %v231 = vld [vmem:[%s220 + $0x18] sm:$0xff]
      %v232 = vld [vmem:[%s220 + $0x20] sm:$0xff]
      %v233 = vld [vmem:[%s220 + $0x28] sm:$0xff]
      %v234 = vld [vmem:[%s220 + $0x30] sm:$0xff]
      %v235 = vld [vmem:[%s220 + $0x38] sm:$0xff]
      %v236 = vld [vmem:[%s1] sm:$0xff]
      %v237 = vld [vmem:[%s1 + $0x8] sm:$0xff]
      %v238 = vld [vmem:[%s1 + $0x10] sm:$0xff]
      %v239 = vld [vmem:[%s1 + $0x18] sm:$0xff]
      %v240 = vld [vmem:[%s2] sm:$0x1]
      %v242 = vlaneseq
      %v243 = vshrl.u32 %v242, 7
      %v244 = vsub.s32 0, %v243
      %v245 = vrot.slane %v240, %v244
      %vm247 = vcmask 261120
      %v249 = vsel %vm247, %v228, 0
      %v252 = vsel %vm247, %v229, 0
      %v255 = vsel %vm247, %v230, 0
      %v258 = vsel %vm247, %v231, 0
      %v261 = vsel %vm247, %v232, 0
      %v264 = vsel %vm247, %v233, 0
      %v267 = vsel %vm247, %v234, 0
      %v270 = vsel %vm247, %v235, 0
      %272 = vmatprep.subr.mxu0 0.0
      %273 = vmatpush1.msra.mxu0 0.0
      %274 = vmatprep.subr.mxu0 0.0
      %275 = vmatpush1.msra.mxu0 0.0
      %276 = vmatprep.subr.mxu0 0.0
      %277 = vmatpush1.msra.mxu0 0.0
      %278 = vmatprep.subr.mxu0 0.0
      %279 = vmatpush1.msra.mxu0 0.0
      %280 = vmatprep.subr.mxu0 0.0
      %281 = vmatpush1.msra.mxu0 0.0
      %282 = vmatprep.subr.mxu0 0.0
      %283 = vmatpush1.msra.mxu0 0.0
      %284 = vmatprep.subr.mxu0 0.0
      %285 = vmatpush1.msra.mxu0 0.0
      %286 = vmatprep.subr.mxu0 0.0
      %287 = vmatpush1.msra.mxu0 0.0
      %288 = vmatprep.subr.mxu0 0.0
      %289 = vmatpush1.msra.mxu0 0.0
      %290 = vmatprep.subr.mxu0 0.0
      %291 = vmatpush1.msra.mxu0 0.0
      %292 = vmatprep.subr.mxu0 0.0
      %293 = vmatpush1.msra.mxu0 0.0
      %294 = vmatprep.subr.mxu0 0.0
      %295 = vmatpush1.msra.mxu0 0.0
      %296 = vmatprep.subr.mxu0 0.0
      %297 = vmatpush1.msra.mxu0 %v239
      %298 = vmatprep.subr.mxu0 0.0
      %299 = vmatpush1.msra.mxu0 %v238
      %300 = vmatprep.subr.mxu0 0.0
      %301 = vmatpush1.msra.mxu0 %v237
      %302 = vmatprep.subr.mxu0 0.0
      %303 = vmatpush1.msra.mxu0 %v236
      %304 = vmatprep.subr.mxu0 0.0
      %305 = vmatpush2.msra.mxu0 0.0
      %306 = vmatprep.subr.mxu0 0.0
      %307 = vmatpush2.msra.mxu0 0.0
      %308 = vmatprep.subr.mxu0 0.0
      %309 = vmatpush2.msra.mxu0 0.0
      %310 = vmatprep.subr.mxu0 0.0
      %311 = vmatpush2.msra.mxu0 0.0
      %312 = vmatprep.subr.mxu0 0.0
      %313 = vmatpush2.msra.mxu0 0.0
      %314 = vmatprep.subr.mxu0 0.0
      %315 = vmatpush2.msra.mxu0 0.0
      %316 = vmatprep.subr.mxu0 0.0
      %317 = vmatpush2.msra.mxu0 0.0
      %318 = vmatprep.subr.mxu0 0.0
      %319 = vmatpush2.msra.mxu0 0.0
      %320 = vmatprep.subr.mxu0 0.0
      %321 = vmatpush2.msra.mxu0 0.0
      %322 = vmatprep.subr.mxu0 0.0
      %323 = vmatpush2.msra.mxu0 0.0
      %324 = vmatprep.subr.mxu0 0.0
      %325 = vmatpush2.msra.mxu0 0.0
      %326 = vmatprep.subr.mxu0 0.0
      %327 = vmatpush2.msra.mxu0 0.0
      %328 = vmatprep.subr.mxu0 0.0
      %329 = vmatpush2.msra.mxu0 0.0
      %330 = vmatprep.subr.mxu0 0.0
      %331 = vmatpush2.msra.mxu0 0.0
      %332 = vmatprep.subr.mxu0 0.0
      %333 = vmatpush2.msra.mxu0 0.0
      %334 = vmatprep.subr.mxu0 0.0
      %335 = vmatpush2.msra.mxu0 0.0
      %336 = vmatprep.mubr.f32.mxu0 0.0
      %337 = vmatmul.mubr.f32.gmra.mxu0 %v249
      %v338 = vpop.f32.mrf.mxu0
      %v339 = vadd.f32 %v245, %v338
      %v340 = vpop.f32.mrf.mxu0
      %341 = vmatprep.mubr.f32.mxu0 0.0
      %342 = vmatmul.mubr.f32.gmra.mxu0 %v252
      %v343 = vpop.f32.mrf.mxu0
      %v344 = vadd.f32 %v245, %v343
      %v345 = vpop.f32.mrf.mxu0
      %346 = vmatprep.mubr.f32.mxu0 0.0
      %347 = vmatmul.mubr.f32.gmra.mxu0 %v255
      %v348 = vpop.f32.mrf.mxu0
      %v349 = vadd.f32 %v245, %v348
      %v350 = vpop.f32.mrf.mxu0
      %351 = vmatprep.mubr.f32.mxu0 0.0
      %352 = vmatmul.mubr.f32.gmra.mxu0 %v258
      %v353 = vpop.f32.mrf.mxu0
      %v354 = vadd.f32 %v245, %v353
      %v355 = vpop.f32.mrf.mxu0
      %356 = vmatprep.mubr.f32.mxu0 0.0
      %357 = vmatmul.mubr.f32.gmra.mxu0 %v261
      %v358 = vpop.f32.mrf.mxu0
      %v359 = vadd.f32 %v245, %v358
      %v360 = vpop.f32.mrf.mxu0
      %361 = vmatprep.mubr.f32.mxu0 0.0
      %362 = vmatmul.mubr.f32.gmra.mxu0 %v264
      %v363 = vpop.f32.mrf.mxu0
      %v364 = vadd.f32 %v245, %v363
      %v365 = vpop.f32.mrf.mxu0
      %366 = vmatprep.mubr.f32.mxu0 0.0
      %367 = vmatmul.mubr.f32.gmra.mxu0 %v267
      %v368 = vpop.f32.mrf.mxu0
      %v369 = vadd.f32 %v245, %v368
      %v370 = vpop.f32.mrf.mxu0
      %371 = vmatprep.mubr.f32.mxu0 0.0
      %372 = vmatmul.mubr.f32.gmra.mxu0 %v270
      %v373 = vpop.f32.mrf.mxu0
      %v374 = vadd.f32 %v245, %v373
      %v375 = vpop.f32.mrf.mxu0
      %376 = vdwg.mxu0
      %v377 = vmul.f32 %v339, 0.2
      %v378 = vmul.f32 %v344, 0.2
      %v379 = vmul.f32 %v349, 0.2
      %v380 = vmul.f32 %v354, 0.2
      %v381 = vmul.f32 %v359, 0.2
      %v382 = vmul.f32 %v364, 0.2
      %v383 = vmul.f32 %v369, 0.2
      %v384 = vmul.f32 %v374, 0.2
      %v385 = vmax.f32 %v339, %v377
      %v386 = vmax.f32 %v344, %v378
      %v387 = vmax.f32 %v349, %v379
      %v388 = vmax.f32 %v354, %v380
      %v389 = vmax.f32 %v359, %v381
      %v390 = vmax.f32 %v364, %v382
      %v391 = vmax.f32 %v369, %v383
      %v392 = vmax.f32 %v374, %v384
      %v393 = vld [vmem:[%s3] sm:$0xff]
      %v394 = vld [vmem:[%s3 + $0x8] sm:$0xff]
      %v395 = vld [vmem:[%s4] sm:$0x1]
      %v397 = vlaneseq
      %v398 = vshrl.u32 %v397, 7
      %v399 = vsub.s32 0, %v398
      %v400 = vrot.slane %v395, %v399
      %vm402 = vcmask 130048
      %v404 = vsel %vm402, %v385, 0
      %v407 = vsel %vm402, %v386, 0
      %v410 = vsel %vm402, %v387, 0
      %v413 = vsel %vm402, %v388, 0
      %v416 = vsel %vm402, %v389, 0
      %v419 = vsel %vm402, %v390, 0
      %v422 = vsel %vm402, %v391, 0
      %v425 = vsel %vm402, %v392, 0
      %427 = vmatprep.subr.mxu0 0.0
      %428 = vmatpush1.msra.mxu0 0.0
      %429 = vmatprep.subr.mxu0 0.0
      %430 = vmatpush1.msra.mxu0 0.0
      %431 = vmatprep.subr.mxu0 0.0
      %432 = vmatpush1.msra.mxu0 0.0
      %433 = vmatprep.subr.mxu0 0.0
      %434 = vmatpush1.msra.mxu0 0.0
      %435 = vmatprep.subr.mxu0 0.0
      %436 = vmatpush1.msra.mxu0 0.0
      %437 = vmatprep.subr.mxu0 0.0
      %438 = vmatpush1.msra.mxu0 0.0
      %439 = vmatprep.subr.mxu0 0.0
      %440 = vmatpush1.msra.mxu0 0.0
      %441 = vmatprep.subr.mxu0 0.0
      %442 = vmatpush1.msra.mxu0 0.0
      %443 = vmatprep.subr.mxu0 0.0
      %444 = vmatpush1.msra.mxu0 0.0
      %445 = vmatprep.subr.mxu0 0.0
      %446 = vmatpush1.msra.mxu0 0.0
      %447 = vmatprep.subr.mxu0 0.0
      %448 = vmatpush1.msra.mxu0 0.0
      %449 = vmatprep.subr.mxu0 0.0
      %450 = vmatpush1.msra.mxu0 0.0
      %451 = vmatprep.subr.mxu0 0.0
      %452 = vmatpush1.msra.mxu0 0.0
      %453 = vmatprep.subr.mxu0 0.0
      %454 = vmatpush1.msra.mxu0 0.0
      %455 = vmatprep.subr.mxu0 0.0
      %456 = vmatpush1.msra.mxu0 %v394
      %457 = vmatprep.subr.mxu0 0.0
      %458 = vmatpush1.msra.mxu0 %v393
      %459 = vmatprep.subr.mxu0 0.0
      %460 = vmatpush2.msra.mxu0 0.0
      %461 = vmatprep.subr.mxu0 0.0
      %462 = vmatpush2.msra.mxu0 0.0
      %463 = vmatprep.subr.mxu0 0.0
      %464 = vmatpush2.msra.mxu0 0.0
      %465 = vmatprep.subr.mxu0 0.0
      %466 = vmatpush2.msra.mxu0 0.0
      %467 = vmatprep.subr.mxu0 0.0
      %468 = vmatpush2.msra.mxu0 0.0
      %469 = vmatprep.subr.mxu0 0.0
      %470 = vmatpush2.msra.mxu0 0.0
      %471 = vmatprep.subr.mxu0 0.0
      %472 = vmatpush2.msra.mxu0 0.0
      %473 = vmatprep.subr.mxu0 0.0
      %474 = vmatpush2.msra.mxu0 0.0
      %475 = vmatprep.subr.mxu0 0.0
      %476 = vmatpush2.msra.mxu0 0.0
      %477 = vmatprep.subr.mxu0 0.0
      %478 = vmatpush2.msra.mxu0 0.0
      %479 = vmatprep.subr.mxu0 0.0
      %480 = vmatpush2.msra.mxu0 0.0
      %481 = vmatprep.subr.mxu0 0.0
      %482 = vmatpush2.msra.mxu0 0.0
      %483 = vmatprep.subr.mxu0 0.0
      %484 = vmatpush2.msra.mxu0 0.0
      %485 = vmatprep.subr.mxu0 0.0
      %486 = vmatpush2.msra.mxu0 0.0
      %487 = vmatprep.subr.mxu0 0.0
      %488 = vmatpush2.msra.mxu0 0.0
      %489 = vmatprep.subr.mxu0 0.0
      %490 = vmatpush2.msra.mxu0 0.0
      %491 = vmatprep.mubr.f32.mxu0 0.0
      %492 = vmatmul.mubr.f32.gmra.mxu0 %v404
      %v493 = vpop.f32.mrf.mxu0
      %v494 = vadd.f32 %v400, %v493
      %v495 = vpop.f32.mrf.mxu0
      %496 = vmatprep.mubr.f32.mxu0 0.0
      %497 = vmatmul.mubr.f32.gmra.mxu0 %v407
      %v498 = vpop.f32.mrf.mxu0
      %v499 = vadd.f32 %v400, %v498
      %v500 = vpop.f32.mrf.mxu0
      %501 = vmatprep.mubr.f32.mxu0 0.0
      %502 = vmatmul.mubr.f32.gmra.mxu0 %v410
      %v503 = vpop.f32.mrf.mxu0
      %v504 = vadd.f32 %v400, %v503
      %v505 = vpop.f32.mrf.mxu0
      %506 = vmatprep.mubr.f32.mxu0 0.0
      %507 = vmatmul.mubr.f32.gmra.mxu0 %v413
      %v508 = vpop.f32.mrf.mxu0
      %v509 = vadd.f32 %v400, %v508
      %v510 = vpop.f32.mrf.mxu0
      %511 = vmatprep.mubr.f32.mxu0 0.0
      %512 = vmatmul.mubr.f32.gmra.mxu0 %v416
      %v513 = vpop.f32.mrf.mxu0
      %v514 = vadd.f32 %v400, %v513
      %v515 = vpop.f32.mrf.mxu0
      %516 = vmatprep.mubr.f32.mxu0 0.0
      %517 = vmatmul.mubr.f32.gmra.mxu0 %v419
      %v518 = vpop.f32.mrf.mxu0
      %v519 = vadd.f32 %v400, %v518
      %v520 = vpop.f32.mrf.mxu0
      %521 = vmatprep.mubr.f32.mxu0 0.0
      %522 = vmatmul.mubr.f32.gmra.mxu0 %v422
      %v523 = vpop.f32.mrf.mxu0
      %v524 = vadd.f32 %v400, %v523
      %v525 = vpop.f32.mrf.mxu0
      %526 = vmatprep.mubr.f32.mxu0 0.0
      %527 = vmatmul.mubr.f32.gmra.mxu0 %v425
      %v528 = vpop.f32.mrf.mxu0
      %v529 = vadd.f32 %v400, %v528
      %v530 = vpop.f32.mrf.mxu0
      %531 = vdwg.mxu0
      %vm532 = vcmask 64512
      %533 = vst.msk [vmem:[%s226] sm:$0xff] %vm532, %v494
      %534 = vst.msk [vmem:[%s226 + $0x8] sm:$0xff] %vm532, %v499
      %535 = vst.msk [vmem:[%s226 + $0x10] sm:$0xff] %vm532, %v504
      %536 = vst.msk [vmem:[%s226 + $0x18] sm:$0xff] %vm532, %v509
      %537 = vst.msk [vmem:[%s226 + $0x20] sm:$0xff] %vm532, %v514
      %538 = vst.msk [vmem:[%s226 + $0x28] sm:$0xff] %vm532, %v519
      %539 = vst.msk [vmem:[%s226 + $0x30] sm:$0xff] %vm532, %v524
      %540 = vst.msk [vmem:[%s226 + $0x38] sm:$0xff] %vm532, %v529
      %s541 = smul.u32 8, %s16
      %p542 = scmp.lt.s32.totalorder %s541, 31
      %s543 = scalar_select %p542, %s541, 31
      %s544 = smul.addr %s543, 8
      %s545 = scalar_lea.vmem %s5, %s544
      // Predicated region
      $region41: #{tpu_custom_call.1} parent=39 // pred_check
        %p546 = pneg %p144
      $region42: #{tpu_custom_call.1} parent=39 // pred_check_branch
        %548 = sbr.rel (%p546) target = $region44
      $region43: #{tpu_custom_call.1} parent=39 // pred_region
        %s549 = smul.u32 8, %s16
      $region44: #{tpu_custom_call.1} parent=39 // pred_fallthru
        _
    $region40: #{tpu_custom_call.1} parent=5 // pred_fallthru
      _
    %p550 = scmp.le.s32.totalorder 2, %s11
    // Predicated region
    $region45: #{tpu_custom_call.1} parent=5 // pred_check
      %p551 = pneg %p550
    $region46: #{tpu_custom_call.1} parent=5 // pred_check_branch
      %553 = sbr.rel (%p551) target = $region48
    $region47: #{tpu_custom_call.1} parent=5 // pred_region
      %s554 = ssub.s32 %s11, 2
      // Predicated region
      $region49: #{tpu_custom_call.1} parent=47 // pred_check
        %p555 = pneg %p150
      $region50: #{tpu_custom_call.1} parent=47 // pred_check_branch
        %557 = sbr.rel (%p555) target = $region52
      $region51: #{tpu_custom_call.1} parent=47 // pred_region
        %s558 = smul.u32 8, %s17
        %p559 = scmp.lt.s32.totalorder %s558, 31
        %s560 = scalar_select %p559, %s558, 31
        %s561 = smul.addr %s560, 8
        %s562 = scalar_lea.vmem %s5, %s561
      $region52: #{tpu_custom_call.1} parent=47 // pred_fallthru
        _
    $region48: #{tpu_custom_call.1} parent=5 // pred_fallthru
      _
  $region6: #{tpu_custom_call.1} parent=0 // loop_footer
    %s15 = sadd.s32 1, %s11
  $region7: #{tpu_custom_call.1} parent=0 // loop_footer_branch
    %10 = sbr.rel target = $region3
  $region8: #{tpu_custom_call.1} parent=0 // loop_exit
    _

</llo_original>
